<compile_context>
chip_gen: v7x
topology: tpu7x:2x2x1
jax: 0.10.0
libtpu: 0.0.40
codegen_flags: <defaults>
</compile_context>

<pallas_src>
import numpy as np
import jax
import jax.numpy as jnp
from jax.experimental import pallas as pl
from jax.experimental.pallas import tpu as pltpu


# ----------------------------------------------------------------------------
# CE: cube <-> equirect projector (bilinear, precomputed tables).  Conventions:
#   equi: (B, C, He, 2*He),  cube: (6*B, C, f, f) with f = He // 2,
#   faces ordered [+X, -X, +Y, -Y, +Z, -Z], batch-major (cube[b*6 + face]).
# The *_rows methods work channels-last on (B, rows, C) and are what the
# fused kernel path uses; the NCHW C2E/E2C are kept only as references.
# ----------------------------------------------------------------------------
class CubeEquiProjector:
    def __init__(self, He):
        self.He = He
        self.We = 2 * He
        self.f = He // 2
        self._build_c2e()
        self._build_e2c()

    @staticmethod
    def _bilinear_tables(face, up, vp, h, w):
        u0f = np.floor(up)
        v0f = np.floor(vp)
        du = (up - u0f).astype(np.float32)
        dv = (vp - v0f).astype(np.float32)
        u0 = np.clip(u0f, 0, w - 1).astype(np.int64)
        u1 = np.clip(u0f + 1, 0, w - 1).astype(np.int64)
        v0 = np.clip(v0f, 0, h - 1).astype(np.int64)
        v1 = np.clip(v0f + 1, 0, h - 1).astype(np.int64)
        base = face.astype(np.int64) * (h * w)
        idx = np.stack([base + v0 * w + u0, base + v0 * w + u1,
                        base + v1 * w + u0, base + v1 * w + u1], 0).reshape(4, -1)
        wgt = np.stack([(1 - du) * (1 - dv), du * (1 - dv),
                        (1 - du) * dv, du * dv], 0).reshape(4, -1).astype(np.float32)
        # packed flat index (4*P,) -> ONE gather; weights (4, P) -> fused einsum.
        return jnp.asarray(idx.reshape(-1), dtype=jnp.int32), jnp.asarray(wgt)

    @staticmethod
    def _dir_to_face_uv(x, y, z):
        ax, ay, az = np.abs(x), np.abs(y), np.abs(z)
        eps = 1e-9
        face = np.zeros(x.shape, np.int32)
        u = np.zeros(x.shape)
        v = np.zeros(x.shape)
        m = (ax >= ay) & (ax >= az) & (x > 0)
        face[m] = 0; u[m] = -z[m] / (ax[m] + eps); v[m] = -y[m] / (ax[m] + eps)
        m = (ax >= ay) & (ax >= az) & (x <= 0)
        face[m] = 1; u[m] = z[m] / (ax[m] + eps); v[m] = -y[m] / (ax[m] + eps)
        m = (ay > ax) & (ay >= az) & (y > 0)
        face[m] = 2; u[m] = x[m] / (ay[m] + eps); v[m] = z[m] / (ay[m] + eps)
        m = (ay > ax) & (ay >= az) & (y <= 0)
        face[m] = 3; u[m] = x[m] / (ay[m] + eps); v[m] = -z[m] / (ay[m] + eps)
        m = (az > ax) & (az > ay) & (z > 0)
        face[m] = 4; u[m] = x[m] / (az[m] + eps); v[m] = -y[m] / (az[m] + eps)
        m = (az > ax) & (az > ay) & (z <= 0)
        face[m] = 5; u[m] = -x[m] / (az[m] + eps); v[m] = -y[m] / (az[m] + eps)
        return face, u, v

    @staticmethod
    def _face_dir(fc, u, v):
        if fc == 0:
            return np.ones_like(u), -v, -u
        if fc == 1:
            return -np.ones_like(u), -v, u
        if fc == 2:
            return u, np.ones_like(u), v
        if fc == 3:
            return u, -np.ones_like(u), -v
        if fc == 4:
            return u, -v, np.ones_like(u)
        return -u, -v, -np.ones_like(u)

    def _build_c2e(self):
        He, We, f = self.He, self.We, self.f
        jj, ii = np.meshgrid(np.arange(We), np.arange(He))
        lon = (jj + 0.5) / We * 2 * np.pi - np.pi
        lat = np.pi / 2 - (ii + 0.5) / He * np.pi
        x = np.cos(lat) * np.sin(lon)
        y = np.sin(lat)
        z = np.cos(lat) * np.cos(lon)
        face, u, v = self._dir_to_face_uv(x, y, z)
        up = (u + 1.0) * 0.5 * f - 0.5
        vp = (v + 1.0) * 0.5 * f - 0.5
        self.c2e_idx, self.c2e_wgt = self._bilinear_tables(face, up, vp, f, f)

    def _build_e2c(self):
        He, We, f = self.He, self.We, self.f
        jj, ii = np.meshgrid(np.arange(f), np.arange(f))
        u = (jj + 0.5) / f * 2.0 - 1.0
        v = (ii + 0.5) / f * 2.0 - 1.0
        xs, ys, zs = [], [], []
        for fc in range(6):
            x, y, z = self._face_dir(fc, u, v)
            xs.append(x); ys.append(y); zs.append(z)
        x = np.stack(xs); y = np.stack(ys); z = np.stack(zs)       # (6, f, f)
        norm = np.sqrt(x * x + y * y + z * z)
        lon = np.arctan2(x, z)
        lat = np.arcsin(np.clip(y / norm, -1.0, 1.0))
        jp = (lon + np.pi) / (2 * np.pi) * We - 0.5
        ip = (np.pi / 2 - lat) / np.pi * He - 0.5
        self.e2c_idx, self.e2c_wgt = self._bilinear_tables(
            np.zeros_like(jp), jp, ip, He, We)

    # ---- channels-last (row-axis) gathers: the hot path -------------------
    def _gather4_rows(self, rows, idx, wgt):
        # rows: (B, R, C); idx: (4*P,) flat row indices; wgt: (4, P).
        # One lane-dense row gather of all 4 taps + fused weighted sum.
        B, _, C = rows.shape
        taps = jnp.take(rows, idx, axis=1)                    # (B, 4*P, C)
        taps = taps.reshape(B, 4, -1, C)
        return jnp.einsum('bkpc,kp->bpc', taps, wgt)          # (B, P, C)

    def C2E_rows(self, cube):
        """(6B, C, f, f) NCHW cube -> (B, He*We, C) channels-last equi rows."""
        B6, C, f, _ = cube.shape
        B = B6 // 6
        rows = cube.reshape(B, 6, C, f, f).transpose(0, 1, 3, 4, 2)
        rows = rows.reshape(B, 6 * f * f, C)
        return self._gather4_rows(rows, self.c2e_idx, self.c2e_wgt)

    def E2C_rows(self, equi_rows):
        """(B, He*We, C) channels-last equi rows -> (6B, C, f, f) NCHW cube."""
        B, _, C = equi_rows.shape
        f = self.f
        out = self._gather4_rows(equi_rows, self.e2c_idx, self.e2c_wgt)
        out = out.reshape(B, 6, f, f, C).transpose(0, 1, 4, 2, 3)
        return out.reshape(B * 6, C, f, f)

    # ---- NCHW (lane-axis) gathers: kept only as test references -----------
    def _gather4(self, flat, idx, wgt):
        taps = jnp.take(flat, idx, axis=-1)                   # (B, C, 4*P)
        taps = taps.reshape(flat.shape[0], flat.shape[1], 4, -1)
        return jnp.einsum('bckp,kp->bcp', taps, wgt)

    def C2E(self, cube):
        B6, C, f, _ = cube.shape
        B = B6 // 6
        cube_flat = cube.reshape(B, 6, C, f * f).transpose(0, 2, 1, 3)
        cube_flat = cube_flat.reshape(B, C, 6 * f * f)
        out = self._gather4(cube_flat, self.c2e_idx, self.c2e_wgt)
        return out.reshape(B, C, self.He, self.We)

    def E2C(self, equi):
        B, C, He, We = equi.shape
        f = self.f
        equi_flat = equi.reshape(B, C, He * We)
        out = self._gather4(equi_flat, self.e2c_idx, self.e2c_wgt)
        out = out.reshape(B, C, 6, f, f).transpose(0, 2, 1, 3, 4)
        return out.reshape(B * 6, C, f, f)


# ----------------------------------------------------------------------------
# Pallas kernel: fused 3x(1x1 conv + folded BN + ReLU) + residual adds.
# No f_cat in HBM (split-weight dots), one fused (2C, 3C) weight + (1, 3C)
# bias, THREE per-branch (tm, C) output stores (no concat / no 3C slab).
# fe/fc arrive as bf16; all accumulation + the epilogue are f32.
# ----------------------------------------------------------------------------
def _fusion_kernel(fe_ref, fc_ref, wt_ref, wb_ref, b_ref,
                   oe_ref, oc_ref, of_ref):
    fe = fe_ref[...].astype(jnp.float32)                      # (tm, C)
    fc = fc_ref[...].astype(jnp.float32)                      # (tm, C)
    y = jnp.dot(fe, wt_ref[...], preferred_element_type=jnp.float32)
    y = y + jnp.dot(fc, wb_ref[...], preferred_element_type=jnp.float32)
    y = jnp.maximum(y + b_ref[...], 0.0)                      # (tm, 3C) f32
    C = fe.shape[1]
    oe_ref[...] = fe + y[:, :C]                               # equi residual
    oc_ref[...] = fc + y[:, C:2 * C]                          # cube residual
    of_ref[...] = y[:, 2 * C:]                                # fusion branch


def _round_up(x, m):
    return (x + m - 1) // m * m


def _tpu_vmem_capacity_bytes():
    try:
        return int(pltpu.get_tpu_info().vmem_capacity_bytes)
    except Exception:
        return 64 << 20        # conservative fallback: v7x per-TensorCore VMEM


def _default_tm():
    # Larger tiles on v7x (3.2 TB/s HBM amortizes the fixed ~0.35us/step cost).
    try:
        kind = jax.devices()[0].device_kind.lower()
    except Exception:
        kind = ""
    return 2048 if "v7" in kind else 1024


def fusion_pallas(f_equi_2d, f_cube_2d, w_top, w_bot, bias, *, tm=None):
    """f_equi_2d, f_cube_2d: (N, C) f32.  w_top/w_bot: (C, 3C).  bias: (1, 3C).
    Returns three (N, C) f32 arrays: equi-branch, cube-branch, fusion-branch."""
    N, C = f_equi_2d.shape
    C3 = 3 * C

    # bf16 streaming of the two activation inputs (the dominant HBM traffic);
    # weights / bias / outputs stay f32, accumulation is f32 in-kernel.
    fe = f_equi_2d.astype(jnp.bfloat16)
    fc = f_cube_2d.astype(jnp.bfloat16)

    if tm is None:
        tm = _default_tm()
    tm = max(8, min(_round_up(tm, 8), _round_up(N, 8)))

    def step_vmem_bytes(t):
        return (2 * 2 * t * C * 2        # fe, fc (bf16), double-buffered
                + 3 * 2 * t * C * 4      # three f32 outputs, double-buffered
                + 2 * 2 * C * C3 * 4     # w_top, w_bot (f32), double-buffered
                + 2 * C3 * 4)            # bias (f32), double-buffered

    # Generation-aware budget: ~48 MiB on v7x (64 MiB/TC), ~96 MiB on v5e/v6e.
    budget = (_tpu_vmem_capacity_bytes() * 3) // 4
    while tm > 128 and step_vmem_bytes(tm) > budget:
        tm = max(128, (tm // 2) // 8 * 8)

    # Ragged last block handled by Pallas: no input padding, no output slice,
    # no even-grid bump (megacore does not need an even grid).
    grid = pl.cdiv(N, tm)
    vmem_limit = int(min(max(step_vmem_bytes(tm) + (2 << 20), 32 << 20), budget))

    row_spec = pl.BlockSpec((tm, C), lambda i: (i, 0))
    w_spec = pl.BlockSpec((C, C3), lambda i: (0, 0))
    b_spec = pl.BlockSpec((1, C3), lambda i: (0, 0))
    out_spec = pl.BlockSpec((tm, C), lambda i: (i, 0))

    return pl.pallas_call(
        _fusion_kernel,
        out_shape=(jax.ShapeDtypeStruct((N, C), jnp.float32),
                   jax.ShapeDtypeStruct((N, C), jnp.float32),
                   jax.ShapeDtypeStruct((N, C), jnp.float32)),
        grid=(grid,),
        in_specs=[row_spec, row_spec, w_spec, w_spec, b_spec],
        out_specs=[out_spec, out_spec, out_spec],
        compiler_params=pltpu.CompilerParams(
            dimension_semantics=("parallel",),
            vmem_limit_bytes=vmem_limit),
    )(fe, fc, w_top, w_bot, bias)


def fusion_module_forward(equi, cube, CE, params):
    """params = (we, be, wc, bc, wf, bf); each w: (2C, C), b: (1, C), BN folded."""
    we, be, wc, bc, wf, bf = params
    B, C, He, We = equi.shape

    # Channels-last rows feeding the kernel.  fc rows come straight out of the
    # row-axis C2E gather -- no NCHW->NHWC transpose of the projected cube.
    fe_rows = equi.transpose(0, 2, 3, 1).reshape(B, He * We, C)
    fc_rows = CE.C2E_rows(cube)                               # (B, He*We, C)

    # Fuse the three branches into one weight / bias; split into top/bottom
    # halves so the kernel never needs a materialized f_cat.
    w_all = jnp.concatenate([we, wc, wf], axis=1)             # (2C, 3C)
    b_all = jnp.concatenate([be, bc, bf], axis=1)             # (1, 3C)

    oe2, oc2, of2 = fusion_pallas(fe_rows.reshape(-1, C), fc_rows.reshape(-1, C),
                                  w_all[:C], w_all[C:], b_all)

    out_equi = oe2.reshape(B, He, We, C).transpose(0, 3, 1, 2)      # NCHW
    out_cube = CE.E2C_rows(oc2.reshape(B, He * We, C))              # (6B,C,f,f)
    f_fusion = of2.reshape(B, He, We, C).transpose(0, 3, 1, 2)      # NCHW
    return out_equi, out_cube, f_fusion


# ----------------------------------------------------------------------------
# Deterministic parameter init: Conv2d(2C -> C, k=1) + BatchNorm2d(C) (eval
# mode, folded into a single (2C, C) weight and (1, C) bias per branch).
# ----------------------------------------------------------------------------
def init_branch(key, C):
    kw, kb = jax.random.split(key)
    wconv = jax.random.normal(kw, (C, 2 * C), jnp.float32) * 0.1   # (C_out, C_in)
    bconv = jax.random.normal(kb, (C,), jnp.float32) * 0.1
    gamma = jnp.linspace(0.8, 1.2, C).astype(jnp.float32)
    beta = jnp.linspace(-0.1, 0.1, C).astype(jnp.float32)
    mean = jnp.linspace(-0.05, 0.05, C).astype(jnp.float32)
    var = jnp.linspace(0.9, 1.1, C).astype(jnp.float32)
    scale = gamma / jnp.sqrt(var + 1e-5)
    w_fold = (wconv.T * scale[None, :]).astype(jnp.float32)        # (2C, C)
    b_fold = ((bconv - mean) * scale + beta).reshape(1, C).astype(jnp.float32)
    return w_fold, b_fold


if __name__ == "__main__":
    B, C, He = 2, 4, 8
    We = 2 * He
    f = He // 2

    key = jax.random.PRNGKey(0)
    k_eq, k_cu, k_e, k_c, k_f = jax.random.split(key, 5)
    equi = jax.random.normal(k_eq, (B, C, He, We), jnp.float32)
    cube = jax.random.normal(k_cu, (6 * B, C, f, f), jnp.float32)

    we, be = init_branch(k_e, C)
    wc, bc = init_branch(k_c, C)
    wf, bf = init_branch(k_f, C)
    params = (we, be, wc, bc, wf, bf)

    CE = CubeEquiProjector(He)

    out_equi, out_cube, f_fusion = fusion_module_forward(equi, cube, CE, params)
    jax.block_until_ready((out_equi, out_cube, f_fusion))

    # --- 1) channels-last row gathers vs. original NCHW-layout gathers -----
    f_cube_nchw = CE.C2E(cube)
    fc_rows = CE.C2E_rows(cube)
    np.testing.assert_allclose(
        np.asarray(fc_rows.reshape(B, He, We, C).transpose(0, 3, 1, 2)),
        np.asarray(f_cube_nchw), rtol=1e-5, atol=1e-5)
    np.testing.assert_allclose(
        np.asarray(CE.E2C_rows(equi.transpose(0, 2, 3, 1).reshape(B, He * We, C))),
        np.asarray(CE.E2C(equi)), rtol=1e-5, atol=1e-5)

    # --- 2) fused conv/BN/ReLU path (reference sees the same bf16-rounded ---
    #        inputs that the kernel streams; reference matmuls at HIGHEST).
    hp = jax.lax.Precision.HIGHEST
    fe2 = equi.transpose(0, 2, 3, 1).reshape(-1, C)
    fc2 = fc_rows.reshape(-1, C)
    fe2b = fe2.astype(jnp.bfloat16).astype(jnp.float32)
    fc2b = fc2.astype(jnp.bfloat16).astype(jnp.float32)
    fcat = jnp.concatenate([fe2b, fc2b], axis=1)
    relu = lambda x: jnp.maximum(x, 0.0)
    ref_oe_rows = fe2b + relu(jnp.dot(fcat, we, precision=hp) + be)
    ref_oc_rows = fc2b + relu(jnp.dot(fcat, wc, precision=hp) + bc)
    ref_of_rows = relu(jnp.dot(fcat, wf, precision=hp) + bf)

    ref_oe = ref_oe_rows.reshape(B, He, We, C).transpose(0, 3, 1, 2)
    ref_of = ref_of_rows.reshape(B, He, We, C).transpose(0, 3, 1, 2)
    ref_oc = CE.E2C(ref_oc_rows.reshape(B, He, We, C).transpose(0, 3, 1, 2))

    np.testing.assert_allclose(np.asarray(out_equi), np.asarray(ref_oe),
                               rtol=2e-3, atol=2e-3)
    np.testing.assert_allclose(np.asarray(out_cube), np.asarray(ref_oc),
                               rtol=2e-3, atol=2e-3)
    np.testing.assert_allclose(np.asarray(f_fusion), np.asarray(ref_of),
                               rtol=2e-3, atol=2e-3)

    print("KERNEL_OK")
</pallas_src>

<mosaic_0001>
module attributes {stable_mosaic.version = 11 : i64} {
  func.func @_fusion_kernel(%arg0: i32, %arg1: memref<256x4xbf16, #tpu.memory_space<vmem>>, %arg2: memref<256x4xbf16, #tpu.memory_space<vmem>>, %arg3: memref<4x12xf32, #tpu.memory_space<vmem>>, %arg4: memref<4x12xf32, #tpu.memory_space<vmem>>, %arg5: memref<1x12xf32, #tpu.memory_space<vmem>>, %arg6: memref<256x4xf32, #tpu.memory_space<vmem>>, %arg7: memref<256x4xf32, #tpu.memory_space<vmem>>, %arg8: memref<256x4xf32, #tpu.memory_space<vmem>>) attributes {dimension_semantics = [#tpu.dimension_semantics<parallel>], iteration_bounds = array<i64: 1>, scalar_prefetch = 0 : i64, scratch_operands = 0 : i64, tpu.core_type = #tpu.core_type<tc>, window_params = [{transform_indices = @transform_0, window_bounds = array<i64: 256, 4>}, {transform_indices = @transform_1, window_bounds = array<i64: 256, 4>}, {pipeline_mode = #tpu.pipeline_mode<synchronous>, transform_indices = @transform_2, window_bounds = array<i64: 4, 12>}, {pipeline_mode = #tpu.pipeline_mode<synchronous>, transform_indices = @transform_3, window_bounds = array<i64: 4, 12>}, {pipeline_mode = #tpu.pipeline_mode<synchronous>, transform_indices = @transform_4, window_bounds = array<i64: 1, 12>}, {transform_indices = @transform_5, window_bounds = array<i64: 256, 4>}, {transform_indices = @transform_6, window_bounds = array<i64: 256, 4>}, {transform_indices = @transform_7, window_bounds = array<i64: 256, 4>}]} {
    %c0 = arith.constant 0 : index
    %c0_0 = arith.constant 0 : index
    %0 = vector.load %arg1[%c0, %c0_0] : memref<256x4xbf16, #tpu.memory_space<vmem>>, vector<256x4xbf16>
    %1 = arith.extf %0 : vector<256x4xbf16> to vector<256x4xf32>
    %c0_1 = arith.constant 0 : index
    %c0_2 = arith.constant 0 : index
    %2 = vector.load %arg2[%c0_1, %c0_2] : memref<256x4xbf16, #tpu.memory_space<vmem>>, vector<256x4xbf16>
    %3 = arith.extf %2 : vector<256x4xbf16> to vector<256x4xf32>
    %c0_3 = arith.constant 0 : index
    %c0_4 = arith.constant 0 : index
    %4 = vector.load %arg3[%c0_3, %c0_4] : memref<4x12xf32, #tpu.memory_space<vmem>>, vector<4x12xf32>
    %cst = arith.constant dense<0.000000e+00> : vector<256x12xf32>
    %5 = tpu.matmul %1, %4, %cst {dimension_numbers = #tpu.dot_dimension_numbers<[1], [0], [0], [1], [0, 0, 1, 1], [], []>} : vector<256x4xf32>, vector<4x12xf32>, vector<256x12xf32> -> vector<256x12xf32>
    %c0_5 = arith.constant 0 : index
    %c0_6 = arith.constant 0 : index
    %6 = vector.load %arg4[%c0_5, %c0_6] : memref<4x12xf32, #tpu.memory_space<vmem>>, vector<4x12xf32>
    %cst_7 = arith.constant dense<0.000000e+00> : vector<256x12xf32>
    %7 = tpu.matmul %3, %6, %cst_7 {dimension_numbers = #tpu.dot_dimension_numbers<[1], [0], [0], [1], [0, 0, 1, 1], [], []>} : vector<256x4xf32>, vector<4x12xf32>, vector<256x12xf32> -> vector<256x12xf32>
    %8 = arith.addf %5, %7 : vector<256x12xf32>
    %c0_8 = arith.constant 0 : index
    %c0_9 = arith.constant 0 : index
    %9 = vector.load %arg5[%c0_8, %c0_9] : memref<1x12xf32, #tpu.memory_space<vmem>>, vector<1x12xf32>
    %10 = vector.broadcast %9 : vector<1x12xf32> to vector<256x12xf32>
    %11 = arith.addf %8, %10 : vector<256x12xf32>
    %cst_10 = arith.constant 0.000000e+00 : f32
    %12 = vector.broadcast %cst_10 : f32 to vector<256x12xf32>
    %13 = arith.maximumf %11, %12 : vector<256x12xf32>
    %14 = vector.extract_strided_slice %13 {offsets = [0, 0], sizes = [256, 4], strides = [1, 1]} : vector<256x12xf32> to vector<256x4xf32>
    %15 = arith.addf %1, %14 : vector<256x4xf32>
    %c0_11 = arith.constant 0 : index
    %c0_12 = arith.constant 0 : index
    %16 = vector.load %arg6[%c0_11, %c0_12] : memref<256x4xf32, #tpu.memory_space<vmem>>, vector<256x4xf32>
    tpu.vector_store %arg6[%c0_11, %c0_12], %15 {strides = array<i32>} : memref<256x4xf32, #tpu.memory_space<vmem>>, vector<256x4xf32>,
    %17 = vector.extract_strided_slice %13 {offsets = [0, 4], sizes = [256, 4], strides = [1, 1]} : vector<256x12xf32> to vector<256x4xf32>
    %18 = arith.addf %3, %17 : vector<256x4xf32>
    %c0_13 = arith.constant 0 : index
    %c0_14 = arith.constant 0 : index
    %19 = vector.load %arg7[%c0_13, %c0_14] : memref<256x4xf32, #tpu.memory_space<vmem>>, vector<256x4xf32>
    tpu.vector_store %arg7[%c0_13, %c0_14], %18 {strides = array<i32>} : memref<256x4xf32, #tpu.memory_space<vmem>>, vector<256x4xf32>,
    %20 = vector.extract_strided_slice %13 {offsets = [0, 8], sizes = [256, 4], strides = [1, 1]} : vector<256x12xf32> to vector<256x4xf32>
    %c0_15 = arith.constant 0 : index
    %c0_16 = arith.constant 0 : index
    %21 = vector.load %arg8[%c0_15, %c0_16] : memref<256x4xf32, #tpu.memory_space<vmem>>, vector<256x4xf32>
    tpu.vector_store %arg8[%c0_15, %c0_16], %20 {strides = array<i32>} : memref<256x4xf32, #tpu.memory_space<vmem>>, vector<256x4xf32>,
    return
  }
  func.func @transform_0(%arg0: i32) -> (i32, i32) {
    %c0_i32 = arith.constant 0 : i32
    %c0_i32_0 = arith.constant 0 : i32
    return %arg0, %c0_i32 : i32, i32
  }
  func.func @transform_1(%arg0: i32) -> (i32, i32) {
    %c0_i32 = arith.constant 0 : i32
    %c0_i32_0 = arith.constant 0 : i32
    return %arg0, %c0_i32 : i32, i32
  }
  func.func @transform_2(%arg0: i32) -> (i32, i32) {
    %c0_i32 = arith.constant 0 : i32
    %c0_i32_0 = arith.constant 0 : i32
    %c0_i32_1 = arith.constant 0 : i32
    return %c0_i32, %c0_i32_0 : i32, i32
  }
  func.func @transform_3(%arg0: i32) -> (i32, i32) {
    %c0_i32 = arith.constant 0 : i32
    %c0_i32_0 = arith.constant 0 : i32
    %c0_i32_1 = arith.constant 0 : i32
    return %c0_i32, %c0_i32_0 : i32, i32
  }
  func.func @transform_4(%arg0: i32) -> (i32, i32) {
    %c0_i32 = arith.constant 0 : i32
    %c0_i32_0 = arith.constant 0 : i32
    %c0_i32_1 = arith.constant 0 : i32
    return %c0_i32, %c0_i32_0 : i32, i32
  }
  func.func @transform_5(%arg0: i32) -> (i32, i32) {
    %c0_i32 = arith.constant 0 : i32
    %c0_i32_0 = arith.constant 0 : i32
    return %arg0, %c0_i32 : i32, i32
  }
  func.func @transform_6(%arg0: i32) -> (i32, i32) {
    %c0_i32 = arith.constant 0 : i32
    %c0_i32_0 = arith.constant 0 : i32
    return %arg0, %c0_i32 : i32, i32
  }
  func.func @transform_7(%arg0: i32) -> (i32, i32) {
    %c0_i32 = arith.constant 0 : i32
    %c0_i32_0 = arith.constant 0 : i32
    return %arg0, %c0_i32 : i32, i32
  }
}

</mosaic_0001>

<llo_original>
// kernel: tpu_custom_call.1
$region0: #{tpu_custom_call.1}
  #allocation0 [shape = 'u32[]', space=smem, size = 0x4, offset = 0x4, fixed_abs, tag = 'smem constant byte address 0x4 - core index']
  #allocation1 [shape = 'u32[144,128]{1,0:T(1,128)}', space=vmem, size = 0x12000, scoped, tag = 'internal scratch']
  %s0 = inlined_call_operand.vmem [shape: bf16[256,4], index: 0, kind: input, shape index: {}]
  %s1 = inlined_call_operand.vmem [shape: bf16[256,4], index: 1, kind: input, shape index: {}]
  %s2 = inlined_call_operand.vmem [shape: f32[4,12], index: 2, kind: input, shape index: {}]
  %s3 = inlined_call_operand.vmem [shape: f32[4,12], index: 3, kind: input, shape index: {}]
  %s4 = inlined_call_operand.vmem [shape: f32[1,12], index: 4, kind: input, shape index: {}]
  %s5 = inlined_call_operand.vmem [shape: f32[256,4], index: 5, kind: output, shape index: {0}]
  %s6 = inlined_call_operand.vmem [shape: f32[256,4], index: 6, kind: output, shape index: {1}]
  %s7 = inlined_call_operand.vmem [shape: f32[256,4], index: 7, kind: output, shape index: {2}]
  %8 = xla_tuple %s5, %s6, %s7
  %s9 = sld [smem:[#allocation0]]
  $region46: #{tpu_custom_call.1} parent=0
    _
  %s11 = ssub.s32 1, %s9
  %s12 = scalar_select 0, %s11, %s9
  // Predicated region
  $region2: #{tpu_custom_call.1} parent=0 // pred_check
    _
  $region3: #{tpu_custom_call.1} parent=0 // pred_check_branch
    %14 = sbr.rel (0) target = $region5
  $region4: #{tpu_custom_call.1} parent=0 // pred_region
    _
  $region5: #{tpu_custom_call.1} parent=0 // pred_fallthru
    _
  // Predicated region
  $region6: #{tpu_custom_call.1} parent=0 // pred_check
    _
  $region7: #{tpu_custom_call.1} parent=0 // pred_check_branch
    %16 = sbr.rel (0) target = $region9
  $region8: #{tpu_custom_call.1} parent=0 // pred_region
    _
  $region9: #{tpu_custom_call.1} parent=0 // pred_fallthru
    _
  // Predicated region
  $region10: #{tpu_custom_call.1} parent=0 // pred_check
    _
  $region11: #{tpu_custom_call.1} parent=0 // pred_check_branch
    %18 = sbr.rel (0) target = $region13
  $region12: #{tpu_custom_call.1} parent=0 // pred_region
    _
  $region13: #{tpu_custom_call.1} parent=0 // pred_fallthru
    _
  // Predicated region
  $region14: #{tpu_custom_call.1} parent=0 // pred_check
    _
  $region15: #{tpu_custom_call.1} parent=0 // pred_check_branch
    %20 = sbr.rel (0) target = $region17
  $region16: #{tpu_custom_call.1} parent=0 // pred_region
    _
  $region17: #{tpu_custom_call.1} parent=0 // pred_fallthru
    _
  // Predicated region
  $region18: #{tpu_custom_call.1} parent=0 // pred_check
    _
  $region19: #{tpu_custom_call.1} parent=0 // pred_check_branch
    %22 = sbr.rel (0) target = $region21
  $region20: #{tpu_custom_call.1} parent=0 // pred_region
    _
  $region21: #{tpu_custom_call.1} parent=0 // pred_fallthru
    _
  %v23 = vld [vmem:[%s0] sm:$0xf]
  %v24 = vld [vmem:[%s0 + $0x4] sm:$0xf]
  %v25 = vld [vmem:[%s0 + $0x8] sm:$0xf]
  %v26 = vld [vmem:[%s0 + $0xc] sm:$0xf]
  %v27 = vld [vmem:[%s0 + $0x10] sm:$0xf]
  %v28 = vld [vmem:[%s0 + $0x14] sm:$0xf]
  %v29 = vld [vmem:[%s0 + $0x18] sm:$0xf]
  %v30 = vld [vmem:[%s0 + $0x1c] sm:$0xf]
  %v31 = vld [vmem:[%s0 + $0x20] sm:$0xf]
  %v32 = vld [vmem:[%s0 + $0x24] sm:$0xf]
  %v33 = vld [vmem:[%s0 + $0x28] sm:$0xf]
  %v34 = vld [vmem:[%s0 + $0x2c] sm:$0xf]
  %v35 = vld [vmem:[%s0 + $0x30] sm:$0xf]
  %v36 = vld [vmem:[%s0 + $0x34] sm:$0xf]
  %v37 = vld [vmem:[%s0 + $0x38] sm:$0xf]
  %v38 = vld [vmem:[%s0 + $0x3c] sm:$0xf]
  %v39 = vld [vmem:[%s0 + $0x40] sm:$0xf]
  %v40 = vld [vmem:[%s0 + $0x44] sm:$0xf]
  %v41 = vld [vmem:[%s0 + $0x48] sm:$0xf]
  %v42 = vld [vmem:[%s0 + $0x4c] sm:$0xf]
  %v43 = vld [vmem:[%s0 + $0x50] sm:$0xf]
  %v44 = vld [vmem:[%s0 + $0x54] sm:$0xf]
  %v45 = vld [vmem:[%s0 + $0x58] sm:$0xf]
  %v46 = vld [vmem:[%s0 + $0x5c] sm:$0xf]
  %v47 = vld [vmem:[%s0 + $0x60] sm:$0xf]
  %v48 = vld [vmem:[%s0 + $0x64] sm:$0xf]
  %v49 = vld [vmem:[%s0 + $0x68] sm:$0xf]
  %v50 = vld [vmem:[%s0 + $0x6c] sm:$0xf]
  %v51 = vld [vmem:[%s0 + $0x70] sm:$0xf]
  %v52 = vld [vmem:[%s0 + $0x74] sm:$0xf]
  %v53 = vld [vmem:[%s0 + $0x78] sm:$0xf]
  %v54 = vld [vmem:[%s0 + $0x7c] sm:$0xf]
  %v55 = vunpack.c.l.bf16 %v23
  %v56 = vunpack.c.l.bf16 %v24
  %v57 = vunpack.c.l.bf16 %v25
  %v58 = vunpack.c.l.bf16 %v26
  %v59 = vunpack.c.l.bf16 %v27
  %v60 = vunpack.c.l.bf16 %v28
  %v61 = vunpack.c.l.bf16 %v29
  %v62 = vunpack.c.l.bf16 %v30
  %v63 = vunpack.c.l.bf16 %v31
  %v64 = vunpack.c.l.bf16 %v32
  %v65 = vunpack.c.l.bf16 %v33
  %v66 = vunpack.c.l.bf16 %v34
  %v67 = vunpack.c.l.bf16 %v35
  %v68 = vunpack.c.l.bf16 %v36
  %v69 = vunpack.c.l.bf16 %v37
  %v70 = vunpack.c.l.bf16 %v38
  %v71 = vunpack.c.l.bf16 %v39
  %v72 = vunpack.c.l.bf16 %v40
  %v73 = vunpack.c.l.bf16 %v41
  %v74 = vunpack.c.l.bf16 %v42
  %v75 = vunpack.c.l.bf16 %v43
  %v76 = vunpack.c.l.bf16 %v44
  %v77 = vunpack.c.l.bf16 %v45
  %v78 = vunpack.c.l.bf16 %v46
  %v79 = vunpack.c.l.bf16 %v47
  %v80 = vunpack.c.l.bf16 %v48
  %v81 = vunpack.c.l.bf16 %v49
  %v82 = vunpack.c.l.bf16 %v50
  %v83 = vunpack.c.l.bf16 %v51
  %v84 = vunpack.c.l.bf16 %v52
  %v85 = vunpack.c.l.bf16 %v53
  %v86 = vunpack.c.l.bf16 %v54
  %v87 = vld [vmem:[%s1] sm:$0xf]
  %v88 = vld [vmem:[%s1 + $0x4] sm:$0xf]
  %v89 = vld [vmem:[%s1 + $0x8] sm:$0xf]
  %v90 = vld [vmem:[%s1 + $0xc] sm:$0xf]
  %v91 = vld [vmem:[%s1 + $0x10] sm:$0xf]
  %v92 = vld [vmem:[%s1 + $0x14] sm:$0xf]
  %v93 = vld [vmem:[%s1 + $0x18] sm:$0xf]
  %v94 = vld [vmem:[%s1 + $0x1c] sm:$0xf]
  %v95 = vld [vmem:[%s1 + $0x20] sm:$0xf]
  %v96 = vld [vmem:[%s1 + $0x24] sm:$0xf]
  %v97 = vld [vmem:[%s1 + $0x28] sm:$0xf]
  %v98 = vld [vmem:[%s1 + $0x2c] sm:$0xf]
  %v99 = vld [vmem:[%s1 + $0x30] sm:$0xf]
  %v100 = vld [vmem:[%s1 + $0x34] sm:$0xf]
  %v101 = vld [vmem:[%s1 + $0x38] sm:$0xf]
  %v102 = vld [vmem:[%s1 + $0x3c] sm:$0xf]
  %v103 = vld [vmem:[%s1 + $0x40] sm:$0xf]
  %v104 = vld [vmem:[%s1 + $0x44] sm:$0xf]
  %v105 = vld [vmem:[%s1 + $0x48] sm:$0xf]
  %v106 = vld [vmem:[%s1 + $0x4c] sm:$0xf]
  %v107 = vld [vmem:[%s1 + $0x50] sm:$0xf]
  %v108 = vld [vmem:[%s1 + $0x54] sm:$0xf]
  %v109 = vld [vmem:[%s1 + $0x58] sm:$0xf]
  %v110 = vld [vmem:[%s1 + $0x5c] sm:$0xf]
  %v111 = vld [vmem:[%s1 + $0x60] sm:$0xf]
  %v112 = vld [vmem:[%s1 + $0x64] sm:$0xf]
  %v113 = vld [vmem:[%s1 + $0x68] sm:$0xf]
  %v114 = vld [vmem:[%s1 + $0x6c] sm:$0xf]
  %v115 = vld [vmem:[%s1 + $0x70] sm:$0xf]
  %v116 = vld [vmem:[%s1 + $0x74] sm:$0xf]
  %v117 = vld [vmem:[%s1 + $0x78] sm:$0xf]
  %v118 = vld [vmem:[%s1 + $0x7c] sm:$0xf]
  %v119 = vunpack.c.l.bf16 %v87
  %v120 = vunpack.c.l.bf16 %v88
  %v121 = vunpack.c.l.bf16 %v89
  %v122 = vunpack.c.l.bf16 %v90
  %v123 = vunpack.c.l.bf16 %v91
  %v124 = vunpack.c.l.bf16 %v92
  %v125 = vunpack.c.l.bf16 %v93
  %v126 = vunpack.c.l.bf16 %v94
  %v127 = vunpack.c.l.bf16 %v95
  %v128 = vunpack.c.l.bf16 %v96
  %v129 = vunpack.c.l.bf16 %v97
  %v130 = vunpack.c.l.bf16 %v98
  %v131 = vunpack.c.l.bf16 %v99
  %v132 = vunpack.c.l.bf16 %v100
  %v133 = vunpack.c.l.bf16 %v101
  %v134 = vunpack.c.l.bf16 %v102
  %v135 = vunpack.c.l.bf16 %v103
  %v136 = vunpack.c.l.bf16 %v104
  %v137 = vunpack.c.l.bf16 %v105
  %v138 = vunpack.c.l.bf16 %v106
  %v139 = vunpack.c.l.bf16 %v107
  %v140 = vunpack.c.l.bf16 %v108
  %v141 = vunpack.c.l.bf16 %v109
  %v142 = vunpack.c.l.bf16 %v110
  %v143 = vunpack.c.l.bf16 %v111
  %v144 = vunpack.c.l.bf16 %v112
  %v145 = vunpack.c.l.bf16 %v113
  %v146 = vunpack.c.l.bf16 %v114
  %v147 = vunpack.c.l.bf16 %v115
  %v148 = vunpack.c.l.bf16 %v116
  %v149 = vunpack.c.l.bf16 %v117
  %v150 = vunpack.c.l.bf16 %v118
  %v151 = vld [vmem:[%s2] sm:$0xf]
  %v152 = vld [vmem:[%s3] sm:$0xf]
  %vm153 = vcmask 31744
  %v155 = vsel %vm153, %v119, 0
  %v158 = vsel %vm153, %v120, 0
  %v161 = vsel %vm153, %v121, 0
  %v164 = vsel %vm153, %v122, 0
  %v167 = vsel %vm153, %v123, 0
  %v170 = vsel %vm153, %v124, 0
  %v173 = vsel %vm153, %v125, 0
  %v176 = vsel %vm153, %v126, 0
  %v179 = vsel %vm153, %v127, 0
  %v182 = vsel %vm153, %v128, 0
  %v185 = vsel %vm153, %v129, 0
  %v188 = vsel %vm153, %v130, 0
  %v191 = vsel %vm153, %v131, 0
  %v194 = vsel %vm153, %v132, 0
  %v197 = vsel %vm153, %v133, 0
  %v200 = vsel %vm153, %v134, 0
  %v203 = vsel %vm153, %v135, 0
  %v206 = vsel %vm153, %v136, 0
  %v209 = vsel %vm153, %v137, 0
  %v212 = vsel %vm153, %v138, 0
  %v215 = vsel %vm153, %v139, 0
  %v218 = vsel %vm153, %v140, 0
  %v221 = vsel %vm153, %v141, 0
  %v224 = vsel %vm153, %v142, 0
  %v227 = vsel %vm153, %v143, 0
  %v230 = vsel %vm153, %v144, 0
  %v233 = vsel %vm153, %v145, 0
  %v236 = vsel %vm153, %v146, 0
  %v239 = vsel %vm153, %v147, 0
  %v242 = vsel %vm153, %v148, 0
  %v245 = vsel %vm153, %v149, 0
  %v248 = vsel %vm153, %v150, 0
  %vm250 = vcmask 1043456
  %v252 = vsel %vm250, %v152, 0
  %254 = vmatprep.subr.mxu0 0.0
  %255 = vmatpush1.msra.mxu0 %v252
  %256 = vmatprep.subr.mxu0 0.0
  %257 = vmatpush1.msra.mxu0 0.0
  %258 = vmatprep.subr.mxu0 0.0
  %259 = vmatpush1.msra.mxu0 0.0
  %260 = vmatprep.subr.mxu0 0.0
  %261 = vmatpush1.msra.mxu0 0.0
  %262 = vmatprep.subr.mxu0 0.0
  %263 = vmatpush1.msra.mxu0 0.0
  %264 = vmatprep.subr.mxu0 0.0
  %265 = vmatpush1.msra.mxu0 0.0
  %266 = vmatprep.subr.mxu0 0.0
  %267 = vmatpush1.msra.mxu0 0.0
  %268 = vmatprep.subr.mxu0 0.0
  %269 = vmatpush1.msra.mxu0 0.0
  %270 = vmatprep.subr.mxu0 0.0
  %271 = vmatpush1.msra.mxu0 0.0
  %272 = vmatprep.subr.mxu0 0.0
  %273 = vmatpush1.msra.mxu0 0.0
  %274 = vmatprep.subr.mxu0 0.0
  %275 = vmatpush1.msra.mxu0 0.0
  %276 = vmatprep.subr.mxu0 0.0
  %277 = vmatpush1.msra.mxu0 0.0
  %278 = vmatprep.subr.mxu0 0.0
  %279 = vmatpush1.msra.mxu0 0.0
  %280 = vmatprep.subr.mxu0 0.0
  %281 = vmatpush1.msra.mxu0 0.0
  %282 = vmatprep.subr.mxu0 0.0
  %283 = vmatpush1.msra.mxu0 0.0
  %284 = vmatprep.subr.mxu0 0.0
  %285 = vmatpush1.msra.mxu0 0.0
  %286 = vmatprep.subr.mxu0 0.0
  %287 = vmatpush1.msra.mxu0 0.0
  %288 = vmatprep.subr.mxu0 0.0
  %289 = vmatpush1.msra.mxu0 0.0
  %290 = vmatprep.subr.mxu0 0.0
  %291 = vmatpush1.msra.mxu0 0.0
  %292 = vmatprep.subr.mxu0 0.0
  %293 = vmatpush1.msra.mxu0 0.0
  %294 = vmatprep.subr.mxu0 0.0
  %295 = vmatpush1.msra.mxu0 0.0
  %296 = vmatprep.subr.mxu0 0.0
  %297 = vmatpush1.msra.mxu0 0.0
  %298 = vmatprep.subr.mxu0 0.0
  %299 = vmatpush1.msra.mxu0 0.0
  %300 = vmatprep.subr.mxu0 0.0
  %301 = vmatpush1.msra.mxu0 0.0
  %302 = vmatprep.subr.mxu0 0.0
  %303 = vmatpush1.msra.mxu0 0.0
  %304 = vmatprep.subr.mxu0 0.0
  %305 = vmatpush1.msra.mxu0 0.0
  %306 = vmatprep.subr.mxu0 0.0
  %307 = vmatpush1.msra.mxu0 0.0
  %308 = vmatprep.subr.mxu0 0.0
  %309 = vmatpush1.msra.mxu0 0.0
  %310 = vmatprep.subr.mxu0 0.0
  %311 = vmatpush1.msra.mxu0 0.0
  %312 = vmatprep.subr.mxu0 0.0
  %313 = vmatpush1.msra.mxu0 0.0
  %314 = vmatprep.subr.mxu0 0.0
  %315 = vmatpush1.msra.mxu0 0.0
  %316 = vmatprep.subr.mxu0 0.0
  %317 = vmatpush1.msra.mxu0 0.0
  %318 = vmatprep.mubr.f32.mxu0 0.0
  %319 = vmatmul.mubr.f32.gmra.mrb[0].mxu0 %v155
  %v320 = vpop.f32.mrb[0].mxu0
  %v321 = vadd.f32 0.0, %v320
  %v322 = vpop.f32.mrb[0].mxu0
  %323 = vmatprep.mubr.f32.mxu0 0.0
  %324 = vmatmul.mubr.f32.gmra.mrb[0].mxu0 %v158
  %v325 = vpop.f32.mrb[0].mxu0
  %v326 = vadd.f32 0.0, %v325
  %v327 = vpop.f32.mrb[0].mxu0
  %328 = vmatprep.mubr.f32.mxu0 0.0
  %329 = vmatmul.mubr.f32.gmra.mrb[0].mxu0 %v161
  %v330 = vpop.f32.mrb[0].mxu0
  %v331 = vadd.f32 0.0, %v330
  %v332 = vpop.f32.mrb[0].mxu0
  %333 = vmatprep.mubr.f32.mxu0 0.0
  %334 = vmatmul.mubr.f32.gmra.mrb[0].mxu0 %v164
  %v335 = vpop.f32.mrb[0].mxu0
  %v336 = vadd.f32 0.0, %v335
  %v337 = vpop.f32.mrb[0].mxu0
  %338 = vmatprep.mubr.f32.mxu0 0.0
  %339 = vmatmul.mubr.f32.gmra.mrb[0].mxu0 %v167
  %v340 = vpop.f32.mrb[0].mxu0
  %v341 = vadd.f32 0.0, %v340
  %v342 = vpop.f32.mrb[0].mxu0
  %343 = vmatprep.mubr.f32.mxu0 0.0
  %344 = vmatmul.mubr.f32.gmra.mrb[0].mxu0 %v170
  %v345 = vpop.f32.mrb[0].mxu0
  %v346 = vadd.f32 0.0, %v345
  %v347 = vpop.f32.mrb[0].mxu0
  %348 = vmatprep.mubr.f32.mxu0 0.0
  %349 = vmatmul.mubr.f32.gmra.mrb[0].mxu0 %v173
  %v350 = vpop.f32.mrb[0].mxu0
  %v351 = vadd.f32 0.0, %v350
  %v352 = vpop.f32.mrb[0].mxu0
  %353 = vmatprep.mubr.f32.mxu0 0.0
  %354 = vmatmul.mubr.f32.gmra.mrb[0].mxu0 %v176
  %v355 = vpop.f32.mrb[0].mxu0
  %v356 = vadd.f32 0.0, %v355
  %v357 = vpop.f32.mrb[0].mxu0
  %358 = vmatprep.mubr.f32.mxu0 0.0
  %359 = vmatmul.mubr.f32.gmra.mrb[0].mxu0 %v179
  %v360 = vpop.f32.mrb[0].mxu0
  %v361 = vadd.f32 0.0, %v360
  %v362 = vpop.f32.mrb[0].mxu0
  %363 = vmatprep.mubr.f32.mxu0 0.0
  %364 = vmatmul.mubr.f32.gmra.mrb[0].mxu0 %v182
  %v365 = vpop.f32.mrb[0].mxu0
  %v366 = vadd.f32 0.0, %v365
  %v367 = vpop.f32.mrb[0].mxu0
  %368 = vmatprep.mubr.f32.mxu0 0.0
  %369 = vmatmul.mubr.f32.gmra.mrb[0].mxu0 %v185
  %v370 = vpop.f32.mrb[0].mxu0
  %v371 = vadd.f32 0.0, %v370
  %v372 = vpop.f32.mrb[0].mxu0
  %373 = vmatprep.mubr.f32.mxu0 0.0
  %374 = vmatmul.mubr.f32.gmra.mrb[0].mxu0 %v188
  %v375 = vpop.f32.mrb[0].mxu0
  %v376 = vadd.f32 0.0, %v375
  %v377 = vpop.f32.mrb[0].mxu0
  %378 = vmatprep.mubr.f32.mxu0 0.0
  %379 = vmatmul.mubr.f32.gmra.mrb[0].mxu0 %v191
  %v380 = vpop.f32.mrb[0].mxu0
  %v381 = vadd.f32 0.0, %v380
  %v382 = vpop.f32.mrb[0].mxu0
  %383 = vmatprep.mubr.f32.mxu0 0.0
  %384 = vmatmul.mubr.f32.gmra.mrb[0].mxu0 %v194
  %v385 = vpop.f32.mrb[0].mxu0
  %v386 = vadd.f32 0.0, %v385
  %v387 = vpop.f32.mrb[0].mxu0
  %388 = vmatprep.mubr.f32.mxu0 0.0
  %389 = vmatmul.mubr.f32.gmra.mrb[0].mxu0 %v197
  %v390 = vpop.f32.mrb[0].mxu0
  %v391 = vadd.f32 0.0, %v390
  %v392 = vpop.f32.mrb[0].mxu0
  %393 = vmatprep.mubr.f32.mxu0 0.0
  %394 = vmatmul.mubr.f32.gmra.mrb[0].mxu0 %v200
  %v395 = vpop.f32.mrb[0].mxu0
  %v396 = vadd.f32 0.0, %v395
  %v397 = vpop.f32.mrb[0].mxu0
  %398 = vmatprep.mubr.f32.mxu0 0.0
  %399 = vmatmul.mubr.f32.gmra.mrb[0].mxu0 %v203
  %v400 = vpop.f32.mrb[0].mxu0
  %v401 = vadd.f32 0.0, %v400
  %v402 = vpop.f32.mrb[0].mxu0
  %403 = vmatprep.mubr.f32.mxu0 0.0
  %404 = vmatmul.mubr.f32.gmra.mrb[0].mxu0 %v206
  %v405 = vpop.f32.mrb[0].mxu0
  %v406 = vadd.f32 0.0, %v405
  %v407 = vpop.f32.mrb[0].mxu0
  %408 = vmatprep.mubr.f32.mxu0 0.0
  %409 = vmatmul.mubr.f32.gmra.mrb[0].mxu0 %v209
  %v410 = vpop.f32.mrb[0].mxu0
  %v411 = vadd.f32 0.0, %v410
  %v412 = vpop.f32.mrb[0].mxu0
  %413 = vmatprep.mubr.f32.mxu0 0.0
  %414 = vmatmul.mubr.f32.gmra.mrb[0].mxu0 %v212
  %v415 = vpop.f32.mrb[0].mxu0
  %v416 = vadd.f32 0.0, %v415
  %v417 = vpop.f32.mrb[0].mxu0
  %418 = vmatprep.mubr.f32.mxu0 0.0
  %419 = vmatmul.mubr.f32.gmra.mrb[0].mxu0 %v215
  %v420 = vpop.f32.mrb[0].mxu0
  %v421 = vadd.f32 0.0, %v420
  %v422 = vpop.f32.mrb[0].mxu0
  %423 = vmatprep.mubr.f32.mxu0 0.0
  %424 = vmatmul.mubr.f32.gmra.mrb[0].mxu0 %v218
  %v425 = vpop.f32.mrb[0].mxu0
  %v426 = vadd.f32 0.0, %v425
  %v427 = vpop.f32.mrb[0].mxu0
  %428 = vmatprep.mubr.f32.mxu0 0.0
  %429 = vmatmul.mubr.f32.gmra.mrb[0].mxu0 %v221
  %v430 = vpop.f32.mrb[0].mxu0
  %v431 = vadd.f32 0.0, %v430
  %v432 = vpop.f32.mrb[0].mxu0
  %433 = vmatprep.mubr.f32.mxu0 0.0
  %434 = vmatmul.mubr.f32.gmra.mrb[0].mxu0 %v224
  %v435 = vpop.f32.mrb[0].mxu0
  %v436 = vadd.f32 0.0, %v435
  %v437 = vpop.f32.mrb[0].mxu0
  %438 = vmatprep.mubr.f32.mxu0 0.0
  %439 = vmatmul.mubr.f32.gmra.mrb[0].mxu0 %v227
  %v440 = vpop.f32.mrb[0].mxu0
  %v441 = vadd.f32 0.0, %v440
  %v442 = vpop.f32.mrb[0].mxu0
  %443 = vmatprep.mubr.f32.mxu0 0.0
  %444 = vmatmul.mubr.f32.gmra.mrb[0].mxu0 %v230
  %v445 = vpop.f32.mrb[0].mxu0
  %v446 = vadd.f32 0.0, %v445
  %v447 = vpop.f32.mrb[0].mxu0
  %448 = vmatprep.mubr.f32.mxu0 0.0
  %449 = vmatmul.mubr.f32.gmra.mrb[0].mxu0 %v233
  %v450 = vpop.f32.mrb[0].mxu0
  %v451 = vadd.f32 0.0, %v450
  %v452 = vpop.f32.mrb[0].mxu0
  %453 = vmatprep.mubr.f32.mxu0 0.0
  %454 = vmatmul.mubr.f32.gmra.mrb[0].mxu0 %v236
  %v455 = vpop.f32.mrb[0].mxu0
  %v456 = vadd.f32 0.0, %v455
  %v457 = vpop.f32.mrb[0].mxu0
  %458 = vmatprep.mubr.f32.mxu0 0.0
  %459 = vmatmul.mubr.f32.gmra.mrb[0].mxu0 %v239
  %v460 = vpop.f32.mrb[0].mxu0
  %v461 = vadd.f32 0.0, %v460
  %v462 = vpop.f32.mrb[0].mxu0
  %463 = vmatprep.mubr.f32.mxu0 0.0
  %464 = vmatmul.mubr.f32.gmra.mrb[0].mxu0 %v242
  %v465 = vpop.f32.mrb[0].mxu0
  %v466 = vadd.f32 0.0, %v465
  %v467 = vpop.f32.mrb[0].mxu0
  %468 = vmatprep.mubr.f32.mxu0 0.0
  %469 = vmatmul.mubr.f32.gmra.mrb[0].mxu0 %v245
  %v470 = vpop.f32.mrb[0].mxu0
  %v471 = vadd.f32 0.0, %v470
  %v472 = vpop.f32.mrb[0].mxu0
  %473 = vmatprep.mubr.f32.mxu0 0.0
  %474 = vmatmul.mubr.f32.gmra.mrb[0].mxu0 %v248
  %v475 = vpop.f32.mrb[0].mxu0
  %v476 = vadd.f32 0.0, %v475
  %v477 = vpop.f32.mrb[0].mxu0
  %478 = vdwg.mxu0
  %v480 = vsel %vm153, %v55, 0
  %v483 = vsel %vm153, %v56, 0
  %v486 = vsel %vm153, %v57, 0
  %v489 = vsel %vm153, %v58, 0
  %v492 = vsel %vm153, %v59, 0
  %v495 = vsel %vm153, %v60, 0
  %v498 = vsel %vm153, %v61, 0
  %v501 = vsel %vm153, %v62, 0
  %v504 = vsel %vm153, %v63, 0
  %v507 = vsel %vm153, %v64, 0
  %v510 = vsel %vm153, %v65, 0
  %v513 = vsel %vm153, %v66, 0
  %v516 = vsel %vm153, %v67, 0
  %v519 = vsel %vm153, %v68, 0
  %v522 = vsel %vm153, %v69, 0
  %v525 = vsel %vm153, %v70, 0
  %v528 = vsel %vm153, %v71, 0
  %v531 = vsel %vm153, %v72, 0
  %v534 = vsel %vm153, %v73, 0
  %v537 = vsel %vm153, %v74, 0
  %v540 = vsel %vm153, %v75, 0
  %v543 = vsel %vm153, %v76, 0
  %v546 = vsel %vm153, %v77, 0
  %v549 = vsel %vm153, %v78, 0
  %v552 = vsel %vm153, %v79, 0
  %v555 = vsel %vm153, %v80, 0
  %v558 = vsel %vm153, %v81, 0
  %v561 = vsel %vm153, %v82, 0
  %v564 = vsel %vm153, %v83, 0
  %v567 = vsel %vm153, %v84, 0
  %v570 = vsel %vm153, %v85, 0
  %v573 = vsel %vm153, %v86, 0
  %v576 = vsel %vm250, %v151, 0
  %578 = vmatprep.subr.mxu0 0.0
  %579 = vmatpush1.msra.mxu0 %v576
  %580 = vmatprep.subr.mxu0 0.0
  %581 = vmatpush1.msra.mxu0 0.0
  %582 = vmatprep.subr.mxu0 0.0
  %583 = vmatpush1.msra.mxu0 0.0
  %584 = vmatprep.subr.mxu0 0.0
  %585 = vmatpush1.msra.mxu0 0.0
  %586 = vmatprep.subr.mxu0 0.0
  %587 = vmatpush1.msra.mxu0 0.0
  %588 = vmatprep.subr.mxu0 0.0
  %589 = vmatpush1.msra.mxu0 0.0
  %590 = vmatprep.subr.mxu0 0.0
  %591 = vmatpush1.msra.mxu0 0.0
  %592 = vmatprep.subr.mxu0 0.0
  %593 = vmatpush1.msra.mxu0 0.0
  %594 = vmatprep.subr.mxu0 0.0
  %595 = vmatpush1.msra.mxu0 0.0
  %596 = vmatprep.subr.mxu0 0.0
  %597 = vmatpush1.msra.mxu0 0.0
  %598 = vmatprep.subr.mxu0 0.0
  %599 = vmatpush1.msra.mxu0 0.0
  %600 = vmatprep.subr.mxu0 0.0
  %601 = vmatpush1.msra.mxu0 0.0
  %602 = vmatprep.subr.mxu0 0.0
  %603 = vmatpush1.msra.mxu0 0.0
  %604 = vmatprep.subr.mxu0 0.0
  %605 = vmatpush1.msra.mxu0 0.0
  %606 = vmatprep.subr.mxu0 0.0
  %607 = vmatpush1.msra.mxu0 0.0
  %608 = vmatprep.subr.mxu0 0.0
  %609 = vmatpush1.msra.mxu0 0.0
  %610 = vmatprep.subr.mxu0 0.0
  %611 = vmatpush1.msra.mxu0 0.0
  %612 = vmatprep.subr.mxu0 0.0
  %613 = vmatpush1.msra.mxu0 0.0
  %614 = vmatprep.subr.mxu0 0.0
  %615 = vmatpush1.msra.mxu0 0.0
  %616 = vmatprep.subr.mxu0 0.0
  %617 = vmatpush1.msra.mxu0 0.0
  %618 = vmatprep.subr.mxu0 0.0
  %619 = vmatpush1.msra.mxu0 0.0
  %620 = vmatprep.subr.mxu0 0.0
  %621 = vmatpush1.msra.mxu0 0.0
  %622 = vmatprep.subr.mxu0 0.0
  %623 = vmatpush1.msra.mxu0 0.0
  %624 = vmatprep.subr.mxu0 0.0
  %625 = vmatpush1.msra.mxu0 0.0
  %626 = vmatprep.subr.mxu0 0.0
  %627 = vmatpush1.msra.mxu0 0.0
  %628 = vmatprep.subr.mxu0 0.0
  %629 = vmatpush1.msra.mxu0 0.0
  %630 = vmatprep.subr.mxu0 0.0
  %631 = vmatpush1.msra.mxu0 0.0
  %632 = vmatprep.subr.mxu0 0.0
  %633 = vmatpush1.msra.mxu0 0.0
  %634 = vmatprep.subr.mxu0 0.0
  %635 = vmatpush1.msra.mxu0 0.0
  %636 = vmatprep.subr.mxu0 0.0
  %637 = vmatpush1.msra.mxu0 0.0
  %638 = vmatprep.subr.mxu0 0.0
  %639 = vmatpush1.msra.mxu0 0.0
  %640 = vmatprep.subr.mxu0 0.0
  %641 = vmatpush1.msra.mxu0 0.0
  %642 = vmatprep.mubr.f32.mxu0 0.0
  %643 = vmatmul.mubr.f32.gmra.mrb[0].mxu0 %v480
  %v644 = vpop.f32.mrb[0].mxu0
  %v645 = vadd.f32 %v321, %v644
  %v646 = vpop.f32.mrb[0].mxu0
  %647 = vmatprep.mubr.f32.mxu0 0.0
  %648 = vmatmul.mubr.f32.gmra.mrb[0].mxu0 %v483
  %v649 = vpop.f32.mrb[0].mxu0
  %v650 = vadd.f32 %v326, %v649
  %v651 = vpop.f32.mrb[0].mxu0
  %652 = vmatprep.mubr.f32.mxu0 0.0
  %653 = vmatmul.mubr.f32.gmra.mrb[0].mxu0 %v486
  %v654 = vpop.f32.mrb[0].mxu0
  %v655 = vadd.f32 %v331, %v654
  %v656 = vpop.f32.mrb[0].mxu0
  %657 = vmatprep.mubr.f32.mxu0 0.0
  %658 = vmatmul.mubr.f32.gmra.mrb[0].mxu0 %v489
  %v659 = vpop.f32.mrb[0].mxu0
  %v660 = vadd.f32 %v336, %v659
  %v661 = vpop.f32.mrb[0].mxu0
  %662 = vmatprep.mubr.f32.mxu0 0.0
  %663 = vmatmul.mubr.f32.gmra.mrb[0].mxu0 %v492
  %v664 = vpop.f32.mrb[0].mxu0
  %v665 = vadd.f32 %v341, %v664
  %v666 = vpop.f32.mrb[0].mxu0
  %667 = vmatprep.mubr.f32.mxu0 0.0
  %668 = vmatmul.mubr.f32.gmra.mrb[0].mxu0 %v495
  %v669 = vpop.f32.mrb[0].mxu0
  %v670 = vadd.f32 %v346, %v669
  %v671 = vpop.f32.mrb[0].mxu0
  %672 = vmatprep.mubr.f32.mxu0 0.0
  %673 = vmatmul.mubr.f32.gmra.mrb[0].mxu0 %v498
  %v674 = vpop.f32.mrb[0].mxu0
  %v675 = vadd.f32 %v351, %v674
  %v676 = vpop.f32.mrb[0].mxu0
  %677 = vmatprep.mubr.f32.mxu0 0.0
  %678 = vmatmul.mubr.f32.gmra.mrb[0].mxu0 %v501
  %v679 = vpop.f32.mrb[0].mxu0
  %v680 = vadd.f32 %v356, %v679
  %v681 = vpop.f32.mrb[0].mxu0
  %682 = vmatprep.mubr.f32.mxu0 0.0
  %683 = vmatmul.mubr.f32.gmra.mrb[0].mxu0 %v504
  %v684 = vpop.f32.mrb[0].mxu0
  %v685 = vadd.f32 %v361, %v684
  %v686 = vpop.f32.mrb[0].mxu0
  %687 = vmatprep.mubr.f32.mxu0 0.0
  %688 = vmatmul.mubr.f32.gmra.mrb[0].mxu0 %v507
  %v689 = vpop.f32.mrb[0].mxu0
  %v690 = vadd.f32 %v366, %v689
  %v691 = vpop.f32.mrb[0].mxu0
  %692 = vmatprep.mubr.f32.mxu0 0.0
  %693 = vmatmul.mubr.f32.gmra.mrb[0].mxu0 %v510
  %v694 = vpop.f32.mrb[0].mxu0
  %v695 = vadd.f32 %v371, %v694
  %v696 = vpop.f32.mrb[0].mxu0
  %697 = vmatprep.mubr.f32.mxu0 0.0
  %698 = vmatmul.mubr.f32.gmra.mrb[0].mxu0 %v513
  %v699 = vpop.f32.mrb[0].mxu0
  %v700 = vadd.f32 %v376, %v699
  %v701 = vpop.f32.mrb[0].mxu0
  %702 = vmatprep.mubr.f32.mxu0 0.0
  %703 = vmatmul.mubr.f32.gmra.mrb[0].mxu0 %v516
  %v704 = vpop.f32.mrb[0].mxu0
  %v705 = vadd.f32 %v381, %v704
  %v706 = vpop.f32.mrb[0].mxu0
  %707 = vmatprep.mubr.f32.mxu0 0.0
  %708 = vmatmul.mubr.f32.gmra.mrb[0].mxu0 %v519
  %v709 = vpop.f32.mrb[0].mxu0
  %v710 = vadd.f32 %v386, %v709
  %v711 = vpop.f32.mrb[0].mxu0
  %712 = vmatprep.mubr.f32.mxu0 0.0
  %713 = vmatmul.mubr.f32.gmra.mrb[0].mxu0 %v522
  %v714 = vpop.f32.mrb[0].mxu0
  %v715 = vadd.f32 %v391, %v714
  %v716 = vpop.f32.mrb[0].mxu0
  %717 = vmatprep.mubr.f32.mxu0 0.0
  %718 = vmatmul.mubr.f32.gmra.mrb[0].mxu0 %v525
  %v719 = vpop.f32.mrb[0].mxu0
  %v720 = vadd.f32 %v396, %v719
  %v721 = vpop.f32.mrb[0].mxu0
  %722 = vmatprep.mubr.f32.mxu0 0.0
  %723 = vmatmul.mubr.f32.gmra.mrb[0].mxu0 %v528
  %v724 = vpop.f32.mrb[0].mxu0
  %v725 = vadd.f32 %v401, %v724
  %v726 = vpop.f32.mrb[0].mxu0
  %727 = vmatprep.mubr.f32.mxu0 0.0
  %728 = vmatmul.mubr.f32.gmra.mrb[0].mxu0 %v531
  %v729 = vpop.f32.mrb[0].mxu0
  %v730 = vadd.f32 %v406, %v729
  %v731 = vpop.f32.mrb[0].mxu0
  %732 = vmatprep.mubr.f32.mxu0 0.0
  %733 = vmatmul.mubr.f32.gmra.mrb[0].mxu0 %v534
  %v734 = vpop.f32.mrb[0].mxu0
  %v735 = vadd.f32 %v411, %v734
  %v736 = vpop.f32.mrb[0].mxu0
  %737 = vmatprep.mubr.f32.mxu0 0.0
  %738 = vmatmul.mubr.f32.gmra.mrb[0].mxu0 %v537
  %v739 = vpop.f32.mrb[0].mxu0
  %v740 = vadd.f32 %v416, %v739
  %v741 = vpop.f32.mrb[0].mxu0
  %742 = vmatprep.mubr.f32.mxu0 0.0
  %743 = vmatmul.mubr.f32.gmra.mrb[0].mxu0 %v540
  %v744 = vpop.f32.mrb[0].mxu0
  %v745 = vadd.f32 %v421, %v744
  %v746 = vpop.f32.mrb[0].mxu0
  %747 = vmatprep.mubr.f32.mxu0 0.0
  %748 = vmatmul.mubr.f32.gmra.mrb[0].mxu0 %v543
  %v749 = vpop.f32.mrb[0].mxu0
  %v750 = vadd.f32 %v426, %v749
  %v751 = vpop.f32.mrb[0].mxu0
  %752 = vmatprep.mubr.f32.mxu0 0.0
  %753 = vmatmul.mubr.f32.gmra.mrb[0].mxu0 %v546
  %v754 = vpop.f32.mrb[0].mxu0
  %v755 = vadd.f32 %v431, %v754
  %v756 = vpop.f32.mrb[0].mxu0
  %757 = vmatprep.mubr.f32.mxu0 0.0
  %758 = vmatmul.mubr.f32.gmra.mrb[0].mxu0 %v549
  %v759 = vpop.f32.mrb[0].mxu0
  %v760 = vadd.f32 %v436, %v759
  %v761 = vpop.f32.mrb[0].mxu0
  %762 = vmatprep.mubr.f32.mxu0 0.0
  %763 = vmatmul.mubr.f32.gmra.mrb[0].mxu0 %v552
  %v764 = vpop.f32.mrb[0].mxu0
  %v765 = vadd.f32 %v441, %v764
  %v766 = vpop.f32.mrb[0].mxu0
  %767 = vmatprep.mubr.f32.mxu0 0.0
  %768 = vmatmul.mubr.f32.gmra.mrb[0].mxu0 %v555
  %v769 = vpop.f32.mrb[0].mxu0
  %v770 = vadd.f32 %v446, %v769
  %v771 = vpop.f32.mrb[0].mxu0
  %772 = vmatprep.mubr.f32.mxu0 0.0
  %773 = vmatmul.mubr.f32.gmra.mrb[0].mxu0 %v558
  %v774 = vpop.f32.mrb[0].mxu0
  %v775 = vadd.f32 %v451, %v774
  %v776 = vpop.f32.mrb[0].mxu0
  %777 = vmatprep.mubr.f32.mxu0 0.0
  %778 = vmatmul.mubr.f32.gmra.mrb[0].mxu0 %v561
  %v779 = vpop.f32.mrb[0].mxu0
  %v780 = vadd.f32 %v456, %v779
  %v781 = vpop.f32.mrb[0].mxu0
  %782 = vmatprep.mubr.f32.mxu0 0.0
  %783 = vmatmul.mubr.f32.gmra.mrb[0].mxu0 %v564
  %v784 = vpop.f32.mrb[0].mxu0
  %v785 = vadd.f32 %v461, %v784
  %v786 = vpop.f32.mrb[0].mxu0
  %787 = vmatprep.mubr.f32.mxu0 0.0
  %788 = vmatmul.mubr.f32.gmra.mrb[0].mxu0 %v567
  %v789 = vpop.f32.mrb[0].mxu0
  %v790 = vadd.f32 %v466, %v789
  %v791 = vpop.f32.mrb[0].mxu0
  %792 = vmatprep.mubr.f32.mxu0 0.0
  %793 = vmatmul.mubr.f32.gmra.mrb[0].mxu0 %v570
  %v794 = vpop.f32.mrb[0].mxu0
  %v795 = vadd.f32 %v471, %v794
  %v796 = vpop.f32.mrb[0].mxu0
  %797 = vmatprep.mubr.f32.mxu0 0.0
  %798 = vmatmul.mubr.f32.gmra.mrb[0].mxu0 %v573
  %v799 = vpop.f32.mrb[0].mxu0
  %v800 = vadd.f32 %v476, %v799
  %v801 = vpop.f32.mrb[0].mxu0
  %802 = vdwg.mxu0
  %v803 = vld [vmem:[%s4] sm:$0x1]
  %v805 = vlaneseq
  %v806 = vshrl.u32 %v805, 7
  %v807 = vsub.s32 0, %v806
  %v808 = vrot.slane %v803, %v807
  %v810 = vadd.f32 %v645, %v808
  %v811 = vadd.f32 %v650, %v808
  %v812 = vadd.f32 %v655, %v808
  %v813 = vadd.f32 %v660, %v808
  %v814 = vadd.f32 %v665, %v808
  %v815 = vadd.f32 %v670, %v808
  %v816 = vadd.f32 %v675, %v808
  %v817 = vadd.f32 %v680, %v808
  %v818 = vadd.f32 %v685, %v808
  %v819 = vadd.f32 %v690, %v808
  %v820 = vadd.f32 %v695, %v808
  %v821 = vadd.f32 %v700, %v808
  %v822 = vadd.f32 %v705, %v808
  %v823 = vadd.f32 %v710, %v808
  %v824 = vadd.f32 %v715, %v808
  %v825 = vadd.f32 %v720, %v808
  %v826 = vadd.f32 %v725, %v808
  %v827 = vadd.f32 %v730, %v808
  %v828 = vadd.f32 %v735, %v808
  %v829 = vadd.f32 %v740, %v808
  %v830 = vadd.f32 %v745, %v808
  %v831 = vadd.f32 %v750, %v808
  %v832 = vadd.f32 %v755, %v808
  %v833 = vadd.f32 %v760, %v808
  %v834 = vadd.f32 %v765, %v808
  %v835 = vadd.f32 %v770, %v808
  %v836 = vadd.f32 %v775, %v808
  %v837 = vadd.f32 %v780, %v808
  %v838 = vadd.f32 %v785, %v808
  %v839 = vadd.f32 %v790, %v808
  %v840 = vadd.f32 %v795, %v808
  %v841 = vadd.f32 %v800, %v808
  %v842 = vmax.f32 %v810, 0.0
  %v843 = vmax.f32 %v811, 0.0
  %v844 = vmax.f32 %v812, 0.0
  %v845 = vmax.f32 %v813, 0.0
  %v846 = vmax.f32 %v814, 0.0
  %v847 = vmax.f32 %v815, 0.0
  %v848 = vmax.f32 %v816, 0.0
  %v849 = vmax.f32 %v817, 0.0
  %v850 = vmax.f32 %v818, 0.0
  %v851 = vmax.f32 %v819, 0.0
  %v852 = vmax.f32 %v820, 0.0
  %v853 = vmax.f32 %v821, 0.0
  %v854 = vmax.f32 %v822, 0.0
  %v855 = vmax.f32 %v823, 0.0
  %v856 = vmax.f32 %v824, 0.0
  %v857 = vmax.f32 %v825, 0.0
  %v858 = vmax.f32 %v826, 0.0
  %v859 = vmax.f32 %v827, 0.0
  %v860 = vmax.f32 %v828, 0.0
  %v861 = vmax.f32 %v829, 0.0
  %v862 = vmax.f32 %v830, 0.0
  %v863 = vmax.f32 %v831, 0.0
  %v864 = vmax.f32 %v832, 0.0
  %v865 = vmax.f32 %v833, 0.0
  %v866 = vmax.f32 %v834, 0.0
  %v867 = vmax.f32 %v835, 0.0
  %v868 = vmax.f32 %v836, 0.0
  %v869 = vmax.f32 %v837, 0.0
  %v870 = vmax.f32 %v838, 0.0
  %v871 = vmax.f32 %v839, 0.0
  %v872 = vmax.f32 %v840, 0.0
  %v873 = vmax.f32 %v841, 0.0
  %v874 = vadd.f32 %v55, %v842
  %v875 = vadd.f32 %v56, %v843
  %v876 = vadd.f32 %v57, %v844
  %v877 = vadd.f32 %v58, %v845
  %v878 = vadd.f32 %v59, %v846
  %v879 = vadd.f32 %v60, %v847
  %v880 = vadd.f32 %v61, %v848
  %v881 = vadd.f32 %v62, %v849
  %v882 = vadd.f32 %v63, %v850
  %v883 = vadd.f32 %v64, %v851
  %v884 = vadd.f32 %v65, %v852
  %v885 = vadd.f32 %v66, %v853
  %v886 = vadd.f32 %v67, %v854
  %v887 = vadd.f32 %v68, %v855
  %v888 = vadd.f32 %v69, %v856
  %v889 = vadd.f32 %v70, %v857
  %v890 = vadd.f32 %v71, %v858
  %v891 = vadd.f32 %v72, %v859
  %v892 = vadd.f32 %v73, %v860
  %v893 = vadd.f32 %v74, %v861
  %v894 = vadd.f32 %v75, %v862
  %v895 = vadd.f32 %v76, %v863
  %v896 = vadd.f32 %v77, %v864
  %v897 = vadd.f32 %v78, %v865
  %v898 = vadd.f32 %v79, %v866
  %v899 = vadd.f32 %v80, %v867
  %v900 = vadd.f32 %v81, %v868
  %v901 = vadd.f32 %v82, %v869
  %v902 = vadd.f32 %v83, %v870
  %v903 = vadd.f32 %v84, %v871
  %v904 = vadd.f32 %v85, %v872
  %v905 = vadd.f32 %v86, %v873
  %906 = vst.msk [vmem:[%s5] sm:$0xff] %vm153, %v874
  %907 = vst.msk [vmem:[%s5 + $0x8] sm:$0xff] %vm153, %v875
  %908 = vst.msk [vmem:[%s5 + $0x10] sm:$0xff] %vm153, %v876
  %909 = vst.msk [vmem:[%s5 + $0x18] sm:$0xff] %vm153, %v877
  %910 = vst.msk [vmem:[%s5 + $0x20] sm:$0xff] %vm153, %v878
  %911 = vst.msk [vmem:[%s5 + $0x28] sm:$0xff] %vm153, %v879
  %912 = vst.msk [vmem:[%s5 + $0x30] sm:$0xff] %vm153, %v880
  %913 = vst.msk [vmem:[%s5 + $0x38] sm:$0xff] %vm153, %v881
  %914 = vst.msk [vmem:[%s5 + $0x40] sm:$0xff] %vm153, %v882
  %915 = vst.msk [vmem:[%s5 + $0x48] sm:$0xff] %vm153, %v883
  %916 = vst.msk [vmem:[%s5 + $0x50] sm:$0xff] %vm153, %v884
  %917 = vst.msk [vmem:[%s5 + $0x58] sm:$0xff] %vm153, %v885
  %918 = vst.msk [vmem:[%s5 + $0x60] sm:$0xff] %vm153, %v886
  %919 = vst.msk [vmem:[%s5 + $0x68] sm:$0xff] %vm153, %v887
  %920 = vst.msk [vmem:[%s5 + $0x70] sm:$0xff] %vm153, %v888
  %921 = vst.msk [vmem:[%s5 + $0x78] sm:$0xff] %vm153, %v889
  %922 = vst.msk [vmem:[%s5 + $0x80] sm:$0xff] %vm153, %v890
  %923 = vst.msk [vmem:[%s5 + $0x88] sm:$0xff] %vm153, %v891
  %924 = vst.msk [vmem:[%s5 + $0x90] sm:$0xff] %vm153, %v892
  %925 = vst.msk [vmem:[%s5 + $0x98] sm:$0xff] %vm153, %v893
  %926 = vst.msk [vmem:[%s5 + $0xa0] sm:$0xff] %vm153, %v894
  %927 = vst.msk [vmem:[%s5 + $0xa8] sm:$0xff] %vm153, %v895
  %928 = vst.msk [vmem:[%s5 + $0xb0] sm:$0xff] %vm153, %v896
  %929 = vst.msk [vmem:[%s5 + $0xb8] sm:$0xff] %vm153, %v897
  %930 = vst.msk [vmem:[%s5 + $0xc0] sm:$0xff] %vm153, %v898
  %931 = vst.msk [vmem:[%s5 + $0xc8] sm:$0xff] %vm153, %v899
  %932 = vst.msk [vmem:[%s5 + $0xd0] sm:$0xff] %vm153, %v900
  %933 = vst.msk [vmem:[%s5 + $0xd8] sm:$0xff] %vm153, %v901
  %934 = vst.msk [vmem:[%s5 + $0xe0] sm:$0xff] %vm153, %v902
  %935 = vst.msk [vmem:[%s5 + $0xe8] sm:$0xff] %vm153, %v903
  %936 = vst.msk [vmem:[%s5 + $0xf0] sm:$0xff] %vm153, %v904
  %937 = vst.msk [vmem:[%s5 + $0xf8] sm:$0xff] %vm153, %v905
  %970 = vrot.lane.b32.xlu0 %v842, 124
  %v971 = vpop.permute.xlu0 %970
  %972 = vrot.lane.b32.xlu0 %v843, 124
  %v973 = vpop.permute.xlu0 %972
  %974 = vrot.lane.b32.xlu0 %v844, 124
  %v975 = vpop.permute.xlu0 %974
  %976 = vrot.lane.b32.xlu0 %v845, 124
  %v977 = vpop.permute.xlu0 %976
  %978 = vrot.lane.b32.xlu0 %v846, 124
  %v979 = vpop.permute.xlu0 %978
  %980 = vrot.lane.b32.xlu0 %v847, 124
  %v981 = vpop.permute.xlu0 %980
  %982 = vrot.lane.b32.xlu0 %v848, 124
  %v983 = vpop.permute.xlu0 %982
  %984 = vrot.lane.b32.xlu0 %v849, 124
  %v985 = vpop.permute.xlu0 %984
  %986 = vrot.lane.b32.xlu0 %v850, 124
  %v987 = vpop.permute.xlu0 %986
  %988 = vrot.lane.b32.xlu0 %v851, 124
  %v989 = vpop.permute.xlu0 %988
  %990 = vrot.lane.b32.xlu0 %v852, 124
  %v991 = vpop.permute.xlu0 %990
  %992 = vrot.lane.b32.xlu0 %v853, 124
  %v993 = vpop.permute.xlu0 %992
  %994 = vrot.lane.b32.xlu0 %v854, 124
  %v995 = vpop.permute.xlu0 %994
  %996 = vrot.lane.b32.xlu0 %v855, 124
  %v997 = vpop.permute.xlu0 %996
  %998 = vrot.lane.b32.xlu0 %v856, 124
  %v999 = vpop.permute.xlu0 %998
  %1000 = vrot.lane.b32.xlu0 %v857, 124
  %v1001 = vpop.permute.xlu0 %1000
  %1002 = vrot.lane.b32.xlu0 %v858, 124
  %v1003 = vpop.permute.xlu0 %1002
  %1004 = vrot.lane.b32.xlu0 %v859, 124
  %v1005 = vpop.permute.xlu0 %1004
  %1006 = vrot.lane.b32.xlu0 %v860, 124
  %v1007 = vpop.permute.xlu0 %1006
  %1008 = vrot.lane.b32.xlu0 %v861, 124
  %v1009 = vpop.permute.xlu0 %1008
  %1010 = vrot.lane.b32.xlu0 %v862, 124
  %v1011 = vpop.permute.xlu0 %1010
  %1012 = vrot.lane.b32.xlu0 %v863, 124
  %v1013 = vpop.permute.xlu0 %1012
  %1014 = vrot.lane.b32.xlu0 %v864, 124
  %v1015 = vpop.permute.xlu0 %1014
  %1016 = vrot.lane.b32.xlu0 %v865, 124
  %v1017 = vpop.permute.xlu0 %1016
  %1018 = vrot.lane.b32.xlu0 %v866, 124
  %v1019 = vpop.permute.xlu0 %1018
  %1020 = vrot.lane.b32.xlu0 %v867, 124
  %v1021 = vpop.permute.xlu0 %1020
  %1022 = vrot.lane.b32.xlu0 %v868, 124
  %v1023 = vpop.permute.xlu0 %1022
  %1024 = vrot.lane.b32.xlu0 %v869, 124
  %v1025 = vpop.permute.xlu0 %1024
  %1026 = vrot.lane.b32.xlu0 %v870, 124
  %v1027 = vpop.permute.xlu0 %1026
  %1028 = vrot.lane.b32.xlu0 %v871, 124
  %v1029 = vpop.permute.xlu0 %1028
  %1030 = vrot.lane.b32.xlu0 %v872, 124
  %v1031 = vpop.permute.xlu0 %1030
  %1032 = vrot.lane.b32.xlu0 %v873, 124
  %v1033 = vpop.permute.xlu0 %1032
  %v1066 = vadd.f32 %v119, %v971
  %v1067 = vadd.f32 %v120, %v973
  %v1068 = vadd.f32 %v121, %v975
  %v1069 = vadd.f32 %v122, %v977
  %v1070 = vadd.f32 %v123, %v979
  %v1071 = vadd.f32 %v124, %v981
  %v1072 = vadd.f32 %v125, %v983
  %v1073 = vadd.f32 %v126, %v985
  %v1074 = vadd.f32 %v127, %v987
  %v1075 = vadd.f32 %v128, %v989
  %v1076 = vadd.f32 %v129, %v991
  %v1077 = vadd.f32 %v130, %v993
  %v1078 = vadd.f32 %v131, %v995
  %v1079 = vadd.f32 %v132, %v997
  %v1080 = vadd.f32 %v133, %v999
  %v1081 = vadd.f32 %v134, %v1001
  %v1082 = vadd.f32 %v135, %v1003
  %v1083 = vadd.f32 %v136, %v1005
  %v1084 = vadd.f32 %v137, %v1007
  %v1085 = vadd.f32 %v138, %v1009
  %v1086 = vadd.f32 %v139, %v1011
  %v1087 = vadd.f32 %v140, %v1013
  %v1088 = vadd.f32 %v141, %v1015
  %v1089 = vadd.f32 %v142, %v1017
  %v1090 = vadd.f32 %v143, %v1019
  %v1091 = vadd.f32 %v144, %v1021
  %v1092 = vadd.f32 %v145, %v1023
  %v1093 = vadd.f32 %v146, %v1025
  %v1094 = vadd.f32 %v147, %v1027
  %v1095 = vadd.f32 %v148, %v1029
  %v1096 = vadd.f32 %v149, %v1031
  %v1097 = vadd.f32 %v150, %v1033
  %1098 = vst.msk [vmem:[%s6] sm:$0xff] %vm153, %v1066
  %1099 = vst.msk [vmem:[%s6 + $0x8] sm:$0xff] %vm153, %v1067
  %1100 = vst.msk [vmem:[%s6 + $0x10] sm:$0xff] %vm153, %v1068
  %1101 = vst.msk [vmem:[%s6 + $0x18] sm:$0xff] %vm153, %v1069
  %1102 = vst.msk [vmem:[%s6 + $0x20] sm:$0xff] %vm153, %v1070
  %1103 = vst.msk [vmem:[%s6 + $0x28] sm:$0xff] %vm153, %v1071
  %1104 = vst.msk [vmem:[%s6 + $0x30] sm:$0xff] %vm153, %v1072
  %1105 = vst.msk [vmem:[%s6 + $0x38] sm:$0xff] %vm153, %v1073
  %1106 = vst.msk [vmem:[%s6 + $0x40] sm:$0xff] %vm153, %v1074
  %1107 = vst.msk [vmem:[%s6 + $0x48] sm:$0xff] %vm153, %v1075
  %1108 = vst.msk [vmem:[%s6 + $0x50] sm:$0xff] %vm153, %v1076
  %1109 = vst.msk [vmem:[%s6 + $0x58] sm:$0xff] %vm153, %v1077
  %1110 = vst.msk [vmem:[%s6 + $0x60] sm:$0xff] %vm153, %v1078
  %1111 = vst.msk [vmem:[%s6 + $0x68] sm:$0xff] %vm153, %v1079
  %1112 = vst.msk [vmem:[%s6 + $0x70] sm:$0xff] %vm153, %v1080
  %1113 = vst.msk [vmem:[%s6 + $0x78] sm:$0xff] %vm153, %v1081
  %1114 = vst.msk [vmem:[%s6 + $0x80] sm:$0xff] %vm153, %v1082
  %1115 = vst.msk [vmem:[%s6 + $0x88] sm:$0xff] %vm153, %v1083
  %1116 = vst.msk [vmem:[%s6 + $0x90] sm:$0xff] %vm153, %v1084
  %1117 = vst.msk [vmem:[%s6 + $0x98] sm:$0xff] %vm153, %v1085
  %1118 = vst.msk [vmem:[%s6 + $0xa0] sm:$0xff] %vm153, %v1086
  %1119 = vst.msk [vmem:[%s6 + $0xa8] sm:$0xff] %vm153, %v1087
  %1120 = vst.msk [vmem:[%s6 + $0xb0] sm:$0xff] %vm153, %v1088
  %1121 = vst.msk [vmem:[%s6 + $0xb8] sm:$0xff] %vm153, %v1089
  %1122 = vst.msk [vmem:[%s6 + $0xc0] sm:$0xff] %vm153, %v1090
  %1123 = vst.msk [vmem:[%s6 + $0xc8] sm:$0xff] %vm153, %v1091
  %1124 = vst.msk [vmem:[%s6 + $0xd0] sm:$0xff] %vm153, %v1092
  %1125 = vst.msk [vmem:[%s6 + $0xd8] sm:$0xff] %vm153, %v1093
  %1126 = vst.msk [vmem:[%s6 + $0xe0] sm:$0xff] %vm153, %v1094
  %1127 = vst.msk [vmem:[%s6 + $0xe8] sm:$0xff] %vm153, %v1095
  %1128 = vst.msk [vmem:[%s6 + $0xf0] sm:$0xff] %vm153, %v1096
  %1129 = vst.msk [vmem:[%s6 + $0xf8] sm:$0xff] %vm153, %v1097
  %1130 = vrot.lane.b32.xlu0 %v842, 120
  %v1131 = vpop.permute.xlu0 %1130
  %1132 = vrot.lane.b32.xlu0 %v843, 120
  %v1133 = vpop.permute.xlu0 %1132
  %1134 = vrot.lane.b32.xlu0 %v844, 120
  %v1135 = vpop.permute.xlu0 %1134
  %1136 = vrot.lane.b32.xlu0 %v845, 120
  %v1137 = vpop.permute.xlu0 %1136
  %1138 = vrot.lane.b32.xlu0 %v846, 120
  %v1139 = vpop.permute.xlu0 %1138
  %1140 = vrot.lane.b32.xlu0 %v847, 120
  %v1141 = vpop.permute.xlu0 %1140
  %1142 = vrot.lane.b32.xlu0 %v848, 120
  %v1143 = vpop.permute.xlu0 %1142
  %1144 = vrot.lane.b32.xlu0 %v849, 120
  %v1145 = vpop.permute.xlu0 %1144
  %1146 = vrot.lane.b32.xlu0 %v850, 120
  %v1147 = vpop.permute.xlu0 %1146
  %1148 = vrot.lane.b32.xlu0 %v851, 120
  %v1149 = vpop.permute.xlu0 %1148
  %1150 = vrot.lane.b32.xlu0 %v852, 120
  %v1151 = vpop.permute.xlu0 %1150
  %1152 = vrot.lane.b32.xlu0 %v853, 120
  %v1153 = vpop.permute.xlu0 %1152
  %1154 = vrot.lane.b32.xlu0 %v854, 120
  %v1155 = vpop.permute.xlu0 %1154
  %1156 = vrot.lane.b32.xlu0 %v855, 120
  %v1157 = vpop.permute.xlu0 %1156
  %1158 = vrot.lane.b32.xlu0 %v856, 120
  %v1159 = vpop.permute.xlu0 %1158
  %1160 = vrot.lane.b32.xlu0 %v857, 120
  %v1161 = vpop.permute.xlu0 %1160
  %1162 = vrot.lane.b32.xlu0 %v858, 120
  %v1163 = vpop.permute.xlu0 %1162
  %1164 = vrot.lane.b32.xlu0 %v859, 120
  %v1165 = vpop.permute.xlu0 %1164
  %1166 = vrot.lane.b32.xlu0 %v860, 120
  %v1167 = vpop.permute.xlu0 %1166
  %1168 = vrot.lane.b32.xlu0 %v861, 120
  %v1169 = vpop.permute.xlu0 %1168
  %1170 = vrot.lane.b32.xlu0 %v862, 120
  %v1171 = vpop.permute.xlu0 %1170
  %1172 = vrot.lane.b32.xlu0 %v863, 120
  %v1173 = vpop.permute.xlu0 %1172
  %1174 = vrot.lane.b32.xlu0 %v864, 120
  %v1175 = vpop.permute.xlu0 %1174
  %1176 = vrot.lane.b32.xlu0 %v865, 120
  %v1177 = vpop.permute.xlu0 %1176
  %1178 = vrot.lane.b32.xlu0 %v866, 120
  %v1179 = vpop.permute.xlu0 %1178
  %1180 = vrot.lane.b32.xlu0 %v867, 120
  %v1181 = vpop.permute.xlu0 %1180
  %1182 = vrot.lane.b32.xlu0 %v868, 120
  %v1183 = vpop.permute.xlu0 %1182
  %1184 = vrot.lane.b32.xlu0 %v869, 120
  %v1185 = vpop.permute.xlu0 %1184
  %1186 = vrot.lane.b32.xlu0 %v870, 120
  %v1187 = vpop.permute.xlu0 %1186
  %1188 = vrot.lane.b32.xlu0 %v871, 120
  %v1189 = vpop.permute.xlu0 %1188
  %1190 = vrot.lane.b32.xlu0 %v872, 120
  %v1191 = vpop.permute.xlu0 %1190
  %1192 = vrot.lane.b32.xlu0 %v873, 120
  %v1193 = vpop.permute.xlu0 %1192
  %1226 = vst.msk [vmem:[%s7] sm:$0xff] %vm153, %v1131
  %1227 = vst.msk [vmem:[%s7 + $0x8] sm:$0xff] %vm153, %v1133
  %1228 = vst.msk [vmem:[%s7 + $0x10] sm:$0xff] %vm153, %v1135
  %1229 = vst.msk [vmem:[%s7 + $0x18] sm:$0xff] %vm153, %v1137
  %1230 = vst.msk [vmem:[%s7 + $0x20] sm:$0xff] %vm153, %v1139
  %1231 = vst.msk [vmem:[%s7 + $0x28] sm:$0xff] %vm153, %v1141
  %1232 = vst.msk [vmem:[%s7 + $0x30] sm:$0xff] %vm153, %v1143
  %1233 = vst.msk [vmem:[%s7 + $0x38] sm:$0xff] %vm153, %v1145
  %1234 = vst.msk [vmem:[%s7 + $0x40] sm:$0xff] %vm153, %v1147
  %1235 = vst.msk [vmem:[%s7 + $0x48] sm:$0xff] %vm153, %v1149
  %1236 = vst.msk [vmem:[%s7 + $0x50] sm:$0xff] %vm153, %v1151
  %1237 = vst.msk [vmem:[%s7 + $0x58] sm:$0xff] %vm153, %v1153
  %1238 = vst.msk [vmem:[%s7 + $0x60] sm:$0xff] %vm153, %v1155
  %1239 = vst.msk [vmem:[%s7 + $0x68] sm:$0xff] %vm153, %v1157
  %1240 = vst.msk [vmem:[%s7 + $0x70] sm:$0xff] %vm153, %v1159
  %1241 = vst.msk [vmem:[%s7 + $0x78] sm:$0xff] %vm153, %v1161
  %1242 = vst.msk [vmem:[%s7 + $0x80] sm:$0xff] %vm153, %v1163
  %1243 = vst.msk [vmem:[%s7 + $0x88] sm:$0xff] %vm153, %v1165
  %1244 = vst.msk [vmem:[%s7 + $0x90] sm:$0xff] %vm153, %v1167
  %1245 = vst.msk [vmem:[%s7 + $0x98] sm:$0xff] %vm153, %v1169
  %1246 = vst.msk [vmem:[%s7 + $0xa0] sm:$0xff] %vm153, %v1171
  %1247 = vst.msk [vmem:[%s7 + $0xa8] sm:$0xff] %vm153, %v1173
  %1248 = vst.msk [vmem:[%s7 + $0xb0] sm:$0xff] %vm153, %v1175
  %1249 = vst.msk [vmem:[%s7 + $0xb8] sm:$0xff] %vm153, %v1177
  %1250 = vst.msk [vmem:[%s7 + $0xc0] sm:$0xff] %vm153, %v1179
  %1251 = vst.msk [vmem:[%s7 + $0xc8] sm:$0xff] %vm153, %v1181
  %1252 = vst.msk [vmem:[%s7 + $0xd0] sm:$0xff] %vm153, %v1183
  %1253 = vst.msk [vmem:[%s7 + $0xd8] sm:$0xff] %vm153, %v1185
  %1254 = vst.msk [vmem:[%s7 + $0xe0] sm:$0xff] %vm153, %v1187
  %1255 = vst.msk [vmem:[%s7 + $0xe8] sm:$0xff] %vm153, %v1189
  %1256 = vst.msk [vmem:[%s7 + $0xf0] sm:$0xff] %vm153, %v1191
  %1257 = vst.msk [vmem:[%s7 + $0xf8] sm:$0xff] %vm153, %v1193
  // Predicated region
  $region22: #{tpu_custom_call.1} parent=0 // pred_check
    _
  $region23: #{tpu_custom_call.1} parent=0 // pred_check_branch
    %1259 = sbr.rel (0) target = $region25
  $region24: #{tpu_custom_call.1} parent=0 // pred_region
    _
  $region25: #{tpu_custom_call.1} parent=0 // pred_fallthru
    _
  // Predicated region
  $region26: #{tpu_custom_call.1} parent=0 // pred_check
    _
  $region27: #{tpu_custom_call.1} parent=0 // pred_check_branch
    %1261 = sbr.rel (0) target = $region29
  $region28: #{tpu_custom_call.1} parent=0 // pred_region
    _
  $region29: #{tpu_custom_call.1} parent=0 // pred_fallthru
    _
  // Predicated region
  $region30: #{tpu_custom_call.1} parent=0 // pred_check
    _
  $region31: #{tpu_custom_call.1} parent=0 // pred_check_branch
    %1263 = sbr.rel (0) target = $region33
  $region32: #{tpu_custom_call.1} parent=0 // pred_region
    _
  $region33: #{tpu_custom_call.1} parent=0 // pred_fallthru
    _
  // Predicated region
  $region34: #{tpu_custom_call.1} parent=0 // pred_check
    _
  $region35: #{tpu_custom_call.1} parent=0 // pred_check_branch
    %1265 = sbr.rel (0) target = $region37
  $region36: #{tpu_custom_call.1} parent=0 // pred_region
    _
  $region37: #{tpu_custom_call.1} parent=0 // pred_fallthru
    _
  // Predicated region
  $region38: #{tpu_custom_call.1} parent=0 // pred_check
    _
  $region39: #{tpu_custom_call.1} parent=0 // pred_check_branch
    %1267 = sbr.rel (0) target = $region41
  $region40: #{tpu_custom_call.1} parent=0 // pred_region
    _
  $region41: #{tpu_custom_call.1} parent=0 // pred_fallthru
    _
  // Predicated region
  $region42: #{tpu_custom_call.1} parent=0 // pred_check
    _
  $region43: #{tpu_custom_call.1} parent=0 // pred_check_branch
    %1269 = sbr.rel (0) target = $region45
  $region44: #{tpu_custom_call.1} parent=0 // pred_region
    _
  $region45: #{tpu_custom_call.1} parent=0 // pred_fallthru
    _

</llo_original>
